<compile_context>
chip_gen: v5e
topology: v5e:2x2
jax: 0.10.0
libtpu: 0.0.40
codegen_flags: <defaults>
</compile_context>

<pallas_src>
import jax
import jax.numpy as jnp
from jax.experimental import pallas as pl
from jax.experimental.pallas import tpu as pltpu

_LANE = 128          # vreg lane width
_SUBLANE_BF16 = 16   # bf16 packs 16 sublanes per vreg
_BATCH_TILE = 1024   # target rows per grid step on the large-batch path


def _round_up(x, m):
    return ((x + m - 1) // m) * m


def _mlp_kernel(x_ref, w1_ref, b1_ref, w2_ref, b2_ref, o_ref):
    # x:  [TB, obs]       f32   (cast to bf16 in-kernel; free VPU work)
    # w1: [obs, HID_PAD]  bf16   b1: [1, HID_PAD] f32
    # w2: [HID_PAD, act]  bf16   b2: [1, act]     f32
    # o:  [TB, act]       bf16   (narrow output -> tiny HBM writeback)
    x = x_ref[...].astype(jnp.bfloat16)
    h = jnp.dot(x, w1_ref[...], preferred_element_type=jnp.float32)      # MXU
    h = jnp.maximum(h + b1_ref[...], 0.0).astype(jnp.bfloat16)           # bias+ReLU (VPU)
    o = jnp.dot(h, w2_ref[...], preferred_element_type=jnp.float32) + b2_ref[...]
    o_ref[...] = o.astype(o_ref.dtype)


def prepare_params(w1, b1, w2, b2):
    """One-time (off hot path) param prep: pad hidden to a full 128-lane vreg,
    weights -> bf16 (MXU native), biases stay f32 and are added in-kernel."""
    obs, hid = w1.shape
    act = w2.shape[1]
    hid_pad = _round_up(hid, _LANE)

    w1_p = jnp.zeros((obs, hid_pad), jnp.float32).at[:, :hid].set(w1).astype(jnp.bfloat16)
    b1_p = jnp.zeros((1, hid_pad), jnp.float32).at[0, :hid].set(b1)
    w2_p = jnp.zeros((hid_pad, act), jnp.float32).at[:hid, :].set(w2).astype(jnp.bfloat16)
    b2_p = b2.reshape(1, act).astype(jnp.float32)
    return w1_p, b1_p, w2_p, b2_p


def _cost_estimate(rows, obs, hid_pad, act):
    flops = 2 * rows * (obs * hid_pad + hid_pad * act)
    bytes_accessed = (rows * obs * 4                         # x (f32)
                      + obs * hid_pad * 2 + hid_pad * 4      # w1 + b1
                      + hid_pad * act * 2 + act * 4          # w2 + b2
                      + rows * act * 2)                      # out (bf16)
    return pl.CostEstimate(flops=flops, transcendentals=0,
                           bytes_accessed=bytes_accessed)


def _net_forward_impl(x, w1_p, b1_p, w2_p, b2_p):
    B, obs = x.shape
    hid_pad = w1_p.shape[1]
    act = w2_p.shape[1]
    params = (w1_p, b1_p, w2_p, b2_p)

    if B <= _BATCH_TILE:
        # Small batch (action selection): grid-less single-block call, full
        # arrays resident in VMEM, no wrapper padding / casting / slicing.
        return pl.pallas_call(
            _mlp_kernel,
            out_shape=jax.ShapeDtypeStruct((B, act), jnp.bfloat16),
            in_specs=[pl.BlockSpec(memory_space=pltpu.MemorySpace.VMEM)] * 5,
            out_specs=pl.BlockSpec(memory_space=pltpu.MemorySpace.VMEM),
            cost_estimate=_cost_estimate(B, obs, hid_pad, act),
        )(x, *params)

    # Large batch: tile the batch dim with ceiling-divide gridding; keep the
    # tile count even so a v7x megacore splits the grid evenly across its two
    # TensorCores (harmless on v5e/v6e).
    n_tiles = pl.cdiv(B, _BATCH_TILE)
    if n_tiles > 1 and n_tiles % 2 == 1:
        n_tiles += 1
    tb = _round_up(pl.cdiv(B, n_tiles), _SUBLANE_BF16)
    b_pad = n_tiles * tb

    x_in = x if b_pad == B else jnp.pad(x, ((0, b_pad - B), (0, 0)))

    out = pl.pallas_call(
        _mlp_kernel,
        out_shape=jax.ShapeDtypeStruct((b_pad, act), jnp.bfloat16),
        grid=(n_tiles,),
        in_specs=[
            pl.BlockSpec((tb, obs), lambda i: (i, 0)),        # x tile
            pl.BlockSpec((obs, hid_pad), lambda i: (0, 0)),   # w1 (resident)
            pl.BlockSpec((1, hid_pad), lambda i: (0, 0)),     # b1
            pl.BlockSpec((hid_pad, act), lambda i: (0, 0)),   # w2
            pl.BlockSpec((1, act), lambda i: (0, 0)),         # b2
        ],
        out_specs=pl.BlockSpec((tb, act), lambda i: (i, 0)),
        compiler_params=pltpu.CompilerParams(
            dimension_semantics=("parallel",)),
        cost_estimate=_cost_estimate(b_pad, obs, hid_pad, act),
    )(x_in, *params)

    return out if b_pad == B else out[:B]


net_forward = jax.jit(_net_forward_impl)


def init_params(key, obs_size, hidden_size, n_actions):
    """PyTorch nn.Linear-style init (uniform +/- 1/sqrt(fan_in))."""
    k1, k2, k3, k4 = jax.random.split(key, 4)
    lim1 = 1.0 / jnp.sqrt(obs_size)
    lim2 = 1.0 / jnp.sqrt(hidden_size)
    w1 = jax.random.uniform(k1, (obs_size, hidden_size), jnp.float32, -lim1, lim1)
    b1 = jax.random.uniform(k2, (hidden_size,), jnp.float32, -lim1, lim1)
    w2 = jax.random.uniform(k3, (hidden_size, n_actions), jnp.float32, -lim2, lim2)
    b2 = jax.random.uniform(k4, (n_actions,), jnp.float32, -lim2, lim2)
    return w1, b1, w2, b2


if __name__ == "__main__":
    obs_size, hidden_size, n_actions = 4, 32, 2

    key = jax.random.PRNGKey(0)
    kx, kp = jax.random.split(key)
    w1, b1, w2, b2 = init_params(kp, obs_size, hidden_size, n_actions)
    params = prepare_params(w1, b1, w2, b2)
    w1_p, b1_p, w2_p, b2_p = params

    def ref_f32(x):  # PyTorch-semantics reference
        return jnp.maximum(x @ w1 + b1, 0.0) @ w2 + b2

    def ref_kernel_math(x):  # emulates exactly what the kernel computes
        h = jnp.dot(x.astype(jnp.bfloat16), w1_p,
                    preferred_element_type=jnp.float32) + b1_p
        h = jnp.maximum(h, 0.0).astype(jnp.bfloat16)
        o = jnp.dot(h, w2_p, preferred_element_type=jnp.float32) + b2_p
        return o.astype(jnp.bfloat16)

    def run_and_check(batch):
        x = jax.random.normal(jax.random.fold_in(kx, batch),
                              (batch, obs_size), jnp.float32)
        out = jax.block_until_ready(net_forward(x, *params))
        assert out.shape == (batch, n_actions)
        out_f32 = out.astype(jnp.float32)
        assert jnp.allclose(out_f32, ref_kernel_math(x).astype(jnp.float32),
                            atol=1e-2, rtol=1e-2)            # kernel math
        assert jnp.allclose(out_f32, ref_f32(x), atol=5e-2, rtol=5e-2)  # vs torch f32
        return out

    run_and_check(16)     # small batch -> grid-less single-block path
    run_and_check(2500)   # ragged large batch -> tiled, even-grid, pad+slice path

    print("KERNEL_OK")
</pallas_src>

<mosaic_0001>
module attributes {stable_mosaic.version = 11 : i64} {
  func.func @_mlp_kernel(%arg0: memref<16x4xf32, #tpu.memory_space<vmem>>, %arg1: memref<4x128xbf16, #tpu.memory_space<vmem>>, %arg2: memref<1x128xf32, #tpu.memory_space<vmem>>, %arg3: memref<128x2xbf16, #tpu.memory_space<vmem>>, %arg4: memref<1x2xf32, #tpu.memory_space<vmem>>, %arg5: memref<16x2xbf16, #tpu.memory_space<vmem>>) attributes {dimension_semantics = [], scalar_prefetch = 0 : i64, scratch_operands = 0 : i64, tpu.core_type = #tpu.core_type<tc>} {
    %c0 = arith.constant 0 : index
    %c0_0 = arith.constant 0 : index
    %0 = vector.load %arg0[%c0, %c0_0] : memref<16x4xf32, #tpu.memory_space<vmem>>, vector<16x4xf32>
    %1 = arith.truncf %0 : vector<16x4xf32> to vector<16x4xbf16>
    %c0_1 = arith.constant 0 : index
    %c0_2 = arith.constant 0 : index
    %2 = vector.load %arg1[%c0_1, %c0_2] : memref<4x128xbf16, #tpu.memory_space<vmem>>, vector<4x128xbf16>
    %cst = arith.constant dense<0.000000e+00> : vector<16x128xf32>
    %3 = tpu.matmul %1, %2, %cst {dimension_numbers = #tpu.dot_dimension_numbers<[1], [0], [0], [1], [0, 0, 1, 1], [], []>} : vector<16x4xbf16>, vector<4x128xbf16>, vector<16x128xf32> -> vector<16x128xf32>
    %c0_3 = arith.constant 0 : index
    %c0_4 = arith.constant 0 : index
    %4 = vector.load %arg2[%c0_3, %c0_4] : memref<1x128xf32, #tpu.memory_space<vmem>>, vector<1x128xf32>
    %5 = vector.broadcast %4 : vector<1x128xf32> to vector<16x128xf32>
    %6 = arith.addf %3, %5 : vector<16x128xf32>
    %cst_5 = arith.constant 0.000000e+00 : f32
    %7 = vector.broadcast %cst_5 : f32 to vector<16x128xf32>
    %8 = arith.maximumf %6, %7 : vector<16x128xf32>
    %9 = arith.truncf %8 : vector<16x128xf32> to vector<16x128xbf16>
    %c0_6 = arith.constant 0 : index
    %c0_7 = arith.constant 0 : index
    %10 = vector.load %arg3[%c0_6, %c0_7] : memref<128x2xbf16, #tpu.memory_space<vmem>>, vector<128x2xbf16>
    %cst_8 = arith.constant dense<0.000000e+00> : vector<16x2xf32>
    %11 = tpu.matmul %9, %10, %cst_8 {dimension_numbers = #tpu.dot_dimension_numbers<[1], [0], [0], [1], [0, 0, 1, 1], [], []>} : vector<16x128xbf16>, vector<128x2xbf16>, vector<16x2xf32> -> vector<16x2xf32>
    %c0_9 = arith.constant 0 : index
    %c0_10 = arith.constant 0 : index
    %12 = vector.load %arg4[%c0_9, %c0_10] : memref<1x2xf32, #tpu.memory_space<vmem>>, vector<1x2xf32>
    %13 = vector.broadcast %12 : vector<1x2xf32> to vector<16x2xf32>
    %14 = arith.addf %11, %13 : vector<16x2xf32>
    %15 = arith.truncf %14 : vector<16x2xf32> to vector<16x2xbf16>
    %c0_11 = arith.constant 0 : index
    %c0_12 = arith.constant 0 : index
    %16 = vector.load %arg5[%c0_11, %c0_12] : memref<16x2xbf16, #tpu.memory_space<vmem>>, vector<16x2xbf16>
    tpu.vector_store %arg5[%c0_11, %c0_12], %15 {strides = array<i32>} : memref<16x2xbf16, #tpu.memory_space<vmem>>, vector<16x2xbf16>,
    return
  }
}

</mosaic_0001>

<llo_original>
// kernel: _net_forward_impl.1
$region0: #{_net_forward_impl.1}
  #allocation0 [shape = 'u32[]', space=smem, size = 0x4, offset = 0x4, fixed_abs, tag = 'smem constant byte address 0x4 - core index']
  #allocation1 [shape = 'u32[72,128]{1,0:T(1,128)}', space=vmem, size = 0x9000, scoped, tag = 'internal scratch']
  %s0 = inlined_call_operand.vmem [shape: f32[16,4], index: 0, kind: input, shape index: {}]
  %s1 = inlined_call_operand.vmem [shape: bf16[4,128], index: 1, kind: input, shape index: {}]
  %s2 = inlined_call_operand.vmem [shape: f32[1,128], index: 2, kind: input, shape index: {}]
  %s3 = inlined_call_operand.vmem [shape: bf16[128,2], index: 3, kind: input, shape index: {}]
  %s4 = inlined_call_operand.vmem [shape: f32[1,2], index: 4, kind: input, shape index: {}]
  %s5 = inlined_call_operand.vmem [shape: bf16[16,2], index: 5, kind: output, shape index: {}]
  %s6 = sld [smem:[#allocation0]]
  $region30: #{_net_forward_impl.1} parent=0
    _
  %s8 = ssub.s32 1, %s6
  %s9 = scalar_select 0, %s8, %s6
  // Predicated region
  $region2: #{_net_forward_impl.1} parent=0 // pred_check
    _
  $region3: #{_net_forward_impl.1} parent=0 // pred_check_branch
    %11 = sbr.rel (0) target = $region5
  $region4: #{_net_forward_impl.1} parent=0 // pred_region
    _
  $region5: #{_net_forward_impl.1} parent=0 // pred_fallthru
    _
  // Predicated region
  $region6: #{_net_forward_impl.1} parent=0 // pred_check
    _
  $region7: #{_net_forward_impl.1} parent=0 // pred_check_branch
    %13 = sbr.rel (0) target = $region9
  $region8: #{_net_forward_impl.1} parent=0 // pred_region
    _
  $region9: #{_net_forward_impl.1} parent=0 // pred_fallthru
    _
  // Predicated region
  $region10: #{_net_forward_impl.1} parent=0 // pred_check
    _
  $region11: #{_net_forward_impl.1} parent=0 // pred_check_branch
    %15 = sbr.rel (0) target = $region13
  $region12: #{_net_forward_impl.1} parent=0 // pred_region
    _
  $region13: #{_net_forward_impl.1} parent=0 // pred_fallthru
    _
  // Predicated region
  $region14: #{_net_forward_impl.1} parent=0 // pred_check
    _
  $region15: #{_net_forward_impl.1} parent=0 // pred_check_branch
    %17 = sbr.rel (0) target = $region17
  $region16: #{_net_forward_impl.1} parent=0 // pred_region
    _
  $region17: #{_net_forward_impl.1} parent=0 // pred_fallthru
    _
  // Predicated region
  $region18: #{_net_forward_impl.1} parent=0 // pred_check
    _
  $region19: #{_net_forward_impl.1} parent=0 // pred_check_branch
    %19 = sbr.rel (0) target = $region21
  $region20: #{_net_forward_impl.1} parent=0 // pred_region
    _
  $region21: #{_net_forward_impl.1} parent=0 // pred_fallthru
    _
  %v21 = vld [vmem:[%s0] sm:$0xff]
  %v22 = vld [vmem:[%s0 + $0x8] sm:$0xff]
  %v23 = vpack.c.bf16 %v22, %v21
  %v24 = vld [vmem:[%s1] sm:$0x3]
  %v25 = vld [vmem:[%s2] sm:$0x1]
  %v27 = vperm.slane %v25, 0
  %vm29 = vcmask 31744
  %v31 = vsel %vm29, %v23, 0
  %vm33 = vcmask 1041408
  %v35 = vsel %vm33, %v24, 0
  %37 = vmatpush.bf16.msra.mxu0 0
  %38 = vmatpush.bf16.msra.mxu0 0
  %39 = vmatpush.bf16.msra.mxu0 0
  %40 = vmatpush.bf16.msra.mxu0 0
  %41 = vmatpush.bf16.msra.mxu0 0
  %42 = vmatpush.bf16.msra.mxu0 0
  %43 = vmatpush.bf16.msra.mxu0 0
  %44 = vmatpush.bf16.msra.mxu0 %v35
  %45 = vmatmul.bf16.gmra.mxu0 %v31
  %v46 = vpop.f32.mrf.mxu0
  %v47 = vadd.f32 %v27, %v46
  %v48 = vpop.f32.mrf.mxu0
  %v49 = vadd.f32 %v27, %v48
  %50 = vdwg.mxu0
  %v51 = vmax.f32 %v47, 0.0
  %v52 = vmax.f32 %v49, 0.0
  %v53 = vpack.c.bf16 %v52, %v51
  %v54 = vld [vmem:[%s3] sm:$0xf]
  %v55 = vld [vmem:[%s3 + $0x4] sm:$0xf]
  %v56 = vld [vmem:[%s3 + $0x8] sm:$0xf]
  %v57 = vld [vmem:[%s3 + $0xc] sm:$0xf]
  %v58 = vld [vmem:[%s3 + $0x10] sm:$0xf]
  %v59 = vld [vmem:[%s3 + $0x14] sm:$0xf]
  %v60 = vld [vmem:[%s3 + $0x18] sm:$0xf]
  %v61 = vld [vmem:[%s3 + $0x1c] sm:$0xf]
  %v62 = vld [vmem:[%s3 + $0x20] sm:$0xf]
  %v63 = vld [vmem:[%s3 + $0x24] sm:$0xf]
  %v64 = vld [vmem:[%s3 + $0x28] sm:$0xf]
  %v65 = vld [vmem:[%s3 + $0x2c] sm:$0xf]
  %v66 = vld [vmem:[%s3 + $0x30] sm:$0xf]
  %v67 = vld [vmem:[%s3 + $0x34] sm:$0xf]
  %v68 = vld [vmem:[%s3 + $0x38] sm:$0xf]
  %v69 = vld [vmem:[%s3 + $0x3c] sm:$0xf]
  %v70 = vld [vmem:[%s4] sm:$0x1]
  %v72 = vperm.slane %v70, 0
  %v90 = vunpack.c.l.b16 %v54
  %v91 = vunpack.c.l.b16 %v55
  %v92 = vunpack.c.l.b16 %v56
  %v93 = vunpack.c.l.b16 %v57
  %v94 = vunpack.c.l.b16 %v58
  %v95 = vunpack.c.l.b16 %v59
  %v96 = vunpack.c.l.b16 %v60
  %v97 = vunpack.c.l.b16 %v61
  %v98 = vunpack.c.l.b16 %v62
  %v99 = vunpack.c.l.b16 %v63
  %v100 = vunpack.c.l.b16 %v64
  %v101 = vunpack.c.l.b16 %v65
  %v102 = vunpack.c.l.b16 %v66
  %v103 = vunpack.c.l.b16 %v67
  %v104 = vunpack.c.l.b16 %v68
  %v105 = vunpack.c.l.b16 %v69
  %v106 = vpack.c.b16 %v91, %v90
  %v107 = vpack.c.b16 %v93, %v92
  %v108 = vpack.c.b16 %v95, %v94
  %v109 = vpack.c.b16 %v97, %v96
  %v110 = vpack.c.b16 %v99, %v98
  %v111 = vpack.c.b16 %v101, %v100
  %v112 = vpack.c.b16 %v103, %v102
  %v113 = vpack.c.b16 %v105, %v104
  %122 = vmatpush.bf16.msra.mxu0 %v113
  %123 = vmatpush.bf16.msra.mxu0 %v112
  %124 = vmatpush.bf16.msra.mxu0 %v111
  %125 = vmatpush.bf16.msra.mxu0 %v110
  %126 = vmatpush.bf16.msra.mxu0 %v109
  %127 = vmatpush.bf16.msra.mxu0 %v108
  %128 = vmatpush.bf16.msra.mxu0 %v107
  %129 = vmatpush.bf16.msra.mxu0 %v106
  %130 = vmatmul.bf16.gmra.mxu0 %v53
  %v131 = vpop.f32.mrf.mxu0
  %v132 = vadd.f32 %v72, %v131
  %v133 = vpop.f32.mrf.mxu0
  %v134 = vadd.f32 %v72, %v133
  %135 = vdwg.mxu0
  %v136 = vpack.c.bf16 %v132, %v132
  %v137 = vpack.c.bf16 %v134, %v134
  %vm138 = vcmask 11264
  %139 = vst.msk [vmem:[%s5] sm:$0xf] %vm138, %v136
  %140 = vst.msk [vmem:[%s5 + $0x4] sm:$0xf] %vm138, %v137
  // Predicated region
  $region22: #{_net_forward_impl.1} parent=0 // pred_check
    _
  $region23: #{_net_forward_impl.1} parent=0 // pred_check_branch
    %142 = sbr.rel (0) target = $region25
  $region24: #{_net_forward_impl.1} parent=0 // pred_region
    _
  $region25: #{_net_forward_impl.1} parent=0 // pred_fallthru
    _
  // Predicated region
  $region26: #{_net_forward_impl.1} parent=0 // pred_check
    _
  $region27: #{_net_forward_impl.1} parent=0 // pred_check_branch
    %144 = sbr.rel (0) target = $region29
  $region28: #{_net_forward_impl.1} parent=0 // pred_region
    _
  $region29: #{_net_forward_impl.1} parent=0 // pred_fallthru
    _

</llo_original>
